<compile_context>
chip_gen: v7x
topology: tpu7x:2x2x1
jax: 0.10.0
libtpu: 0.0.40
codegen_flags: <defaults>
</compile_context>

<pallas_src>
import functools

import jax
import jax.numpy as jnp
from jax import lax
from jax.experimental import pallas as pl
from jax.experimental.pallas import tpu as pltpu


def _round_up(a, b):
    return (a + b - 1) // b * b


def _similarity_kernel(x_ref, y_ref, o_ref, xs_ref, *, temp, eps, mxu_dtype):
    """One (TM, TN) tile of -cos(x_i, y_j) / temp.

    Grid = (i over M tiles ["parallel"], j over N tiles ["arbitrary", inner]).
    x_ref  : (TM, H) block index depends only on i -> resident across the j sweep.
    xs_ref : (TM, H) scratch holding the normalized x tile scaled by -1/temp;
             computed once per i tile (at j == 0) and reused for every j.
    y_ref  : (TN, H) normalized per step (fresh tile each j when streaming; when
             y is fully VMEM-resident the renorm is redundant across i but cheap
             relative to the per-step matmul for SimCSE-sized grids).
    """

    @pl.when(pl.program_id(1) == 0)
    def _():
        xf = x_ref[...].astype(jnp.float32)
        # torch clamps ||x||*||y|| at eps*eps; here each inverse norm is clamped
        # at 1/eps.  Identical unless a row norm < eps (degenerate embeddings).
        inv_x = jnp.minimum(
            lax.rsqrt(jnp.sum(xf * xf, axis=-1, keepdims=True)), 1.0 / eps
        )
        xs_ref[...] = (xf * (inv_x * (-1.0 / temp))).astype(mxu_dtype)

    yf = y_ref[...].astype(jnp.float32)
    inv_y = jnp.minimum(
        lax.rsqrt(jnp.sum(yf * yf, axis=-1, keepdims=True)), 1.0 / eps
    )
    y_s = (yf * inv_y).astype(mxu_dtype)

    # Contract both operands on their last (lane) axis -> no explicit y.T
    # relayout; bf16 MXU matmul with f32 accumulation.
    o_ref[...] = lax.dot_general(
        xs_ref[...],
        y_s,
        dimension_numbers=(((1,), (1,)), ((), ())),
        preferred_element_type=jnp.float32,
    ).astype(o_ref.dtype)


def _as_2d(a, which):
    if a.ndim == 2:
        return a
    if a.ndim == 3:
        if which == "x" and a.shape[1] == 1:
            return a[:, 0, :]
        if which == "y" and a.shape[0] == 1:
            return a[0]
    raise ValueError(
        f"Unsupported shape for {which}: {a.shape}. Expected (M, H) or the "
        "SimCSE broadcast pattern x:(B,1,H) / y:(1,B,H)."
    )


def _vmem_capacity_bytes():
    try:
        info = pltpu.get_tpu_info()
        for attr in ("vmem_capacity_bytes", "vmem_bytes", "vmem_size_bytes"):
            v = getattr(info, attr, None)
            if v:
                return int(v)
    except Exception:
        pass
    return 64 << 20  # conservative: v7x per-TensorCore VMEM


def similarity(x, y, *, temp, eps=1e-8, matmul_dtype=None):
    """-cosine_similarity(x, y, dim=-1) / temp (pairwise).

    Accepts the SimCSE broadcast pattern x: (B, 1, H), y: (1, B, H) -> (B, B),
    or plain 2-D x: (M, H), y: (N, H) -> (M, N) pairwise similarities.
    """
    x2 = _as_2d(x, "x")
    y2 = _as_2d(y, "y")

    M, H = x2.shape
    N, H2 = y2.shape
    if H != H2:
        raise ValueError(f"feature dims must match, got {H} vs {H2}")

    in_dtype = jnp.result_type(x2.dtype, y2.dtype)
    x2 = x2.astype(in_dtype)
    y2 = y2.astype(in_dtype)

    # bf16 matmul (f32 accumulation) by default for all float inputs; pass
    # matmul_dtype=jnp.float32 to force the (slower, emulated) exact f32 path.
    mxu_dtype = jnp.bfloat16 if matmul_dtype is None else matmul_dtype
    out_dtype = in_dtype

    in_b = jnp.dtype(in_dtype).itemsize
    out_b = jnp.dtype(out_dtype).itemsize
    mxu_b = jnp.dtype(mxu_dtype).itemsize

    # bf16 packs 16 sublanes per vreg -> round the row-tile to 16 when any
    # bf16 block (input or normalized-x scratch) is involved.
    bf16 = jnp.dtype(jnp.bfloat16)
    row_align = 16 if (jnp.dtype(in_dtype) == bf16 or jnp.dtype(mxu_dtype) == bf16) else 8

    vmem_cap = _vmem_capacity_bytes()
    budget = int(0.65 * vmem_cap)  # leave headroom for compiler-internal scratch

    def ws_bytes(tm, tn):
        return (
            2 * tm * H * in_b      # x tile (double-buffered)
            + 2 * tn * H * in_b    # y tile / resident block (double-buffered)
            + 2 * tm * tn * out_b  # output tile (double-buffered)
            + tm * H * mxu_b       # normalized-x scratch
        )

    # TM: MXU-sized, and aim for >= 2 i-tiles so both v7x TensorCores get work.
    TM = max(row_align, min(256, _round_up(pl.cdiv(M, 2), row_align)))
    Np_full = _round_up(N, 128)
    tn_candidates = [Np_full] + [t for t in (2048, 1024, 512, 256, 128) if t < Np_full]

    TN = None
    while True:
        TN = next((t for t in tn_candidates if ws_bytes(TM, t) <= budget), None)
        if TN is not None or TM <= row_align:
            break
        TM = max(row_align, _round_up(TM // 2, row_align))
    if TN is None:
        # TODO(synk): block the H (feature) axis (K grid axis + f32 accumulator
        # + norm pre-pass) for extremely large H; minimal tiles used here.
        TN = 128

    Mp = _round_up(M, TM)
    Np = _round_up(N, TN)
    if Mp != M:
        x2 = jnp.pad(x2, ((0, Mp - M), (0, 0)))
    if Np != N:
        y2 = jnp.pad(y2, ((0, Np - N), (0, 0)))

    vmem_limit = int(min(0.9 * vmem_cap, max(ws_bytes(TM, TN) + (8 << 20), 32 << 20)))

    kernel = functools.partial(
        _similarity_kernel, temp=float(temp), eps=float(eps), mxu_dtype=mxu_dtype
    )

    out = pl.pallas_call(
        kernel,
        out_shape=jax.ShapeDtypeStruct((Mp, Np), out_dtype),
        grid_spec=pltpu.PrefetchScalarGridSpec(
            num_scalar_prefetch=0,
            grid=(Mp // TM, Np // TN),
            in_specs=[
                pl.BlockSpec((TM, H), lambda i, j: (i, 0)),   # resident across j
                pl.BlockSpec((TN, H), lambda i, j: (j, 0)),   # streamed (or fully resident)
            ],
            out_specs=pl.BlockSpec((TM, TN), lambda i, j: (i, j)),
            scratch_shapes=[pltpu.VMEM((TM, H), mxu_dtype)],
        ),
        compiler_params=pltpu.CompilerParams(
            # j must run in-order for the x-scratch cache -> "arbitrary";
            # i is independent -> "parallel" (megacore on v7x).
            dimension_semantics=("parallel", "arbitrary"),
            vmem_limit_bytes=vmem_limit,
        ),
    )(x2, y2)

    return out[:M, :N]


if __name__ == "__main__":
    # Small, deterministic example consistent with SimCSE usage:
    # z1: (B, 1, H), z2: (1, B, H) -> similarity matrix (B, B).
    B, H = 8, 32
    temp = 0.05

    key = jax.random.PRNGKey(0)
    kx, ky = jax.random.split(key)
    x = jax.random.normal(kx, (B, 1, H), dtype=jnp.float32)
    y = jax.random.normal(ky, (1, B, H), dtype=jnp.float32)

    out = jax.block_until_ready(similarity(x, y, temp=temp))

    # Pure-JAX reference (same math as torch CosineSimilarity).
    x2 = x[:, 0, :]
    y2 = y[0, :, :]
    xn = jnp.maximum(jnp.linalg.norm(x2, axis=-1, keepdims=True), 1e-8)
    yn = jnp.maximum(jnp.linalg.norm(y2, axis=-1, keepdims=True), 1e-8)
    ref = -(x2 @ y2.T) / (xn * yn.T) / temp
    assert out.shape == (B, B)
    # bf16 MXU operands with f32 accumulation: ~1e-3 relative error on cos,
    # scaled by 1/temp = 20 -> allow a modest absolute tolerance.
    assert jnp.allclose(out, ref, atol=0.15, rtol=0.02), float(jnp.max(jnp.abs(out - ref)))

    # Non-trivial tiled case (multiple i tiles, padded/lane-dense N).
    M2, N2, H2 = 200, 300, 64
    kx2, ky2 = jax.random.split(jax.random.PRNGKey(1))
    xa = jax.random.normal(kx2, (M2, H2), dtype=jnp.float32)
    yb = jax.random.normal(ky2, (N2, H2), dtype=jnp.float32)
    out2 = jax.block_until_ready(similarity(xa, yb, temp=temp))
    xan = jnp.maximum(jnp.linalg.norm(xa, axis=-1, keepdims=True), 1e-8)
    ybn = jnp.maximum(jnp.linalg.norm(yb, axis=-1, keepdims=True), 1e-8)
    ref2 = -(xa @ yb.T) / (xan * ybn.T) / temp
    assert out2.shape == (M2, N2)
    assert jnp.allclose(out2, ref2, atol=0.15, rtol=0.02), float(jnp.max(jnp.abs(out2 - ref2)))

    # bf16 input path (bf16 matmul, bf16 output logits).
    xb = x.astype(jnp.bfloat16)
    ybf = y.astype(jnp.bfloat16)
    out3 = jax.block_until_ready(similarity(xb, ybf, temp=temp))
    assert out3.shape == (B, B) and out3.dtype == jnp.bfloat16
    assert jnp.allclose(out3.astype(jnp.float32), ref, atol=0.3, rtol=0.05)

    print("KERNEL_OK")
</pallas_src>

<mosaic_0001>
module attributes {stable_mosaic.version = 11 : i64} {
  func.func @_similarity_kernel(%arg0: i32, %arg1: i32, %arg2: memref<16x32xf32, #tpu.memory_space<vmem>>, %arg3: memref<128x32xf32, #tpu.memory_space<vmem>>, %arg4: memref<16x128xf32, #tpu.memory_space<vmem>>, %arg5: memref<16x32xbf16, #tpu.memory_space<vmem>>) attributes {dimension_semantics = [#tpu.dimension_semantics<parallel>, #tpu.dimension_semantics<arbitrary>], iteration_bounds = array<i64: 1, 1>, scalar_prefetch = 0 : i64, scratch_operands = 1 : i64, tpu.core_type = #tpu.core_type<tc>, window_params = [{transform_indices = @transform_0, window_bounds = array<i64: 16, 32>}, {transform_indices = @transform_1, window_bounds = array<i64: 128, 32>}, {transform_indices = @transform_2, window_bounds = array<i64: 16, 128>}]} {
    %c0_i32 = arith.constant 0 : i32
    %0 = arith.cmpi eq, %arg1, %c0_i32 : i32
    %1 = arith.extui %0 : i1 to i32
    %c0_i32_0 = arith.constant 0 : i32
    %2 = arith.cmpi ne, %1, %c0_i32_0 : i32
    scf.if %2 {
      %c0_8 = arith.constant 0 : index
      %c0_9 = arith.constant 0 : index
      %16 = vector.load %arg2[%c0_8, %c0_9] : memref<16x32xf32, #tpu.memory_space<vmem>>, vector<16x32xf32>
      %17 = arith.mulf %16, %16 : vector<16x32xf32>
      %cst_10 = arith.constant dense<0.000000e+00> : vector<16xf32>
      %18 = vector.multi_reduction <add>, %17, %cst_10 [1] : vector<16x32xf32> to vector<16xf32>
      %19 = vector.shape_cast %18 : vector<16xf32> to vector<16x1xf32>
      %20 = math.rsqrt %19 : vector<16x1xf32>
      %cst_11 = arith.constant 1.000000e+08 : f32
      %21 = vector.broadcast %cst_11 : f32 to vector<16x1xf32>
      %22 = arith.minimumf %20, %21 : vector<16x1xf32>
      %cst_12 = arith.constant -2.000000e+01 : f32
      %23 = vector.broadcast %cst_12 : f32 to vector<16x1xf32>
      %24 = arith.mulf %22, %23 : vector<16x1xf32>
      %25 = vector.broadcast %24 : vector<16x1xf32> to vector<16x32xf32>
      %26 = arith.mulf %16, %25 : vector<16x32xf32>
      %27 = arith.truncf %26 : vector<16x32xf32> to vector<16x32xbf16>
      %c0_13 = arith.constant 0 : index
      %c0_14 = arith.constant 0 : index
      %28 = vector.load %arg5[%c0_13, %c0_14] : memref<16x32xbf16, #tpu.memory_space<vmem>>, vector<16x32xbf16>
      tpu.vector_store %arg5[%c0_13, %c0_14], %27 {strides = array<i32>} : memref<16x32xbf16, #tpu.memory_space<vmem>>, vector<16x32xbf16>,
    } else {
    }
    %c0 = arith.constant 0 : index
    %c0_1 = arith.constant 0 : index
    %3 = vector.load %arg3[%c0, %c0_1] : memref<128x32xf32, #tpu.memory_space<vmem>>, vector<128x32xf32>
    %4 = arith.mulf %3, %3 : vector<128x32xf32>
    %cst = arith.constant dense<0.000000e+00> : vector<128xf32>
    %5 = vector.multi_reduction <add>, %4, %cst [1] : vector<128x32xf32> to vector<128xf32>
    %6 = vector.shape_cast %5 : vector<128xf32> to vector<128x1xf32>
    %7 = math.rsqrt %6 : vector<128x1xf32>
    %cst_2 = arith.constant 1.000000e+08 : f32
    %8 = vector.broadcast %cst_2 : f32 to vector<128x1xf32>
    %9 = arith.minimumf %7, %8 : vector<128x1xf32>
    %10 = vector.broadcast %9 : vector<128x1xf32> to vector<128x32xf32>
    %11 = arith.mulf %3, %10 : vector<128x32xf32>
    %12 = arith.truncf %11 : vector<128x32xf32> to vector<128x32xbf16>
    %c0_3 = arith.constant 0 : index
    %c0_4 = arith.constant 0 : index
    %13 = vector.load %arg5[%c0_3, %c0_4] : memref<16x32xbf16, #tpu.memory_space<vmem>>, vector<16x32xbf16>
    %cst_5 = arith.constant dense<0.000000e+00> : vector<16x128xf32>
    %14 = tpu.matmul %13, %12, %cst_5 {dimension_numbers = #tpu.dot_dimension_numbers<[1], [1], [0], [0], [0, 0, 1, 0], [], []>} : vector<16x32xbf16>, vector<128x32xbf16>, vector<16x128xf32> -> vector<16x128xf32>
    %c0_6 = arith.constant 0 : index
    %c0_7 = arith.constant 0 : index
    %15 = vector.load %arg4[%c0_6, %c0_7] : memref<16x128xf32, #tpu.memory_space<vmem>>, vector<16x128xf32>
    tpu.vector_store %arg4[%c0_6, %c0_7], %14 {strides = array<i32>} : memref<16x128xf32, #tpu.memory_space<vmem>>, vector<16x128xf32>,
    return
  }
  func.func @transform_0(%arg0: i32, %arg1: i32) -> (i32, i32) {
    %c0_i32 = arith.constant 0 : i32
    %c0_i32_0 = arith.constant 0 : i32
    return %arg0, %c0_i32 : i32, i32
  }
  func.func @transform_1(%arg0: i32, %arg1: i32) -> (i32, i32) {
    %c0_i32 = arith.constant 0 : i32
    %c0_i32_0 = arith.constant 0 : i32
    return %arg1, %c0_i32 : i32, i32
  }
  func.func @transform_2(%arg0: i32, %arg1: i32) -> (i32, i32) {
    %c0_i32 = arith.constant 0 : i32
    return %arg0, %arg1 : i32, i32
  }
}

</mosaic_0001>

<llo_original>
// kernel: tpu_custom_call.1
$region0: #{tpu_custom_call.1}
  #allocation0 [shape = 'u32[]', space=smem, size = 0x4, offset = 0x4, fixed_abs, tag = 'smem constant byte address 0x4 - core index']
  #allocation1 [shape = 'u32[144,128]{1,0:T(1,128)}', space=vmem, size = 0x12000, scoped, tag = 'internal scratch']
  #allocation2 [shape = 'bf16[16,32]{1,0:T(16,128)(2,1)}', space=vmem, size = 0x1000, scoped, tag = 'scratch operand']
  %s0 = inlined_call_operand.vmem [shape: f32[16,32], index: 0, kind: input, shape index: {}]
  %s1 = inlined_call_operand.vmem [shape: f32[128,32], index: 1, kind: input, shape index: {}]
  %s2 = inlined_call_operand.hbm [shape: f32[16,128], index: 2, kind: output, shape index: {}]
  %s3 = sld [smem:[#allocation0]]
  $region22: #{tpu_custom_call.1} parent=0
    _
  %s5 = ssub.s32 1, %s3
  %s6 = scalar_select 0, %s5, %s3
  $region1: #{tpu_custom_call.1} parent=0
    #allocation3 [shape = 'u8[8192]{0}', space=vmem, size = 0x2000, scoped, tag = 'output window, operand 0, single buffered']
    #allocation4 [shape = 's32[1]{0}', space=sflag, size = 0x4, scoped, tag = 'scoped memory for tpu_custom_call.1']
    %7 = vsyncpa [#allocation4], 0
    // Predicated region
    $region2: #{tpu_custom_call.1} parent=1 // pred_check
      _
    $region3: #{tpu_custom_call.1} parent=1 // pred_check_branch
      %9 = sbr.rel (0) target = $region5
    $region4: #{tpu_custom_call.1} parent=1 // pred_region
      _
    $region5: #{tpu_custom_call.1} parent=1 // pred_fallthru
      _
    // Predicated region
    $region6: #{tpu_custom_call.1} parent=1 // pred_check
      _
    $region7: #{tpu_custom_call.1} parent=1 // pred_check_branch
      %11 = sbr.rel (0) target = $region9
    $region8: #{tpu_custom_call.1} parent=1 // pred_region
      _
    $region9: #{tpu_custom_call.1} parent=1 // pred_fallthru
      _
    %p13 = scmp.eq.s32.totalorder 0, 0
    // Predicated region
    $region10: #{tpu_custom_call.1} parent=1 // pred_check
      %p14 = pneg %p13
    $region11: #{tpu_custom_call.1} parent=1 // pred_check_branch
      %16 = sbr.rel (%p14) target = $region13
    $region12: #{tpu_custom_call.1} parent=1 // pred_region
      %v17 = vld [vmem:[%s0] sm:$0xff]
      %v18 = vld [vmem:[%s0 + $0x8] sm:$0xff]
      %v19 = vmul.f32 %v17, %v17
      %v20 = vmul.f32 %v18, %v18
      %vm21 = vcmask 261120
      %v22 = vsel %vm21, %v19, 0.0
      %23 = vadd.xlane.f32.xlu0 %v22
      %v24 = vpop.xlane.xlu0 %23
      %v25 = vsel %vm21, %v20, 0.0
      %26 = vadd.xlane.f32.xlu0 %v25
      %v27 = vpop.xlane.xlu0 %26
      %v28 = vrsqrt.pop %v24
      %v29 = vrsqrt.pop %v27
      %v30 = vmin.f32 %v28, 1e+08
      %v31 = vmin.f32 %v29, 1e+08
      %v32 = vmul.f32 %v30, -20.0
      %v33 = vmul.f32 %v31, -20.0
      %v34 = vmul.f32 %v17, %v32
      %v35 = vmul.f32 %v18, %v33
      %v36 = vpack.c.bf16 %v35, %v34
      %37 = vst.msk [vmem:[#allocation2] sm:$0xff] %vm21, %v36
    $region13: #{tpu_custom_call.1} parent=1 // pred_fallthru
      _
    %v38 = vld [vmem:[%s1] sm:$0xff]
    %v39 = vld [vmem:[%s1 + $0x8] sm:$0xff]
    %v40 = vld [vmem:[%s1 + $0x10] sm:$0xff]
    %v41 = vld [vmem:[%s1 + $0x18] sm:$0xff]
    %v42 = vld [vmem:[%s1 + $0x20] sm:$0xff]
    %v43 = vld [vmem:[%s1 + $0x28] sm:$0xff]
    %v44 = vld [vmem:[%s1 + $0x30] sm:$0xff]
    %v45 = vld [vmem:[%s1 + $0x38] sm:$0xff]
    %v46 = vld [vmem:[%s1 + $0x40] sm:$0xff]
    %v47 = vld [vmem:[%s1 + $0x48] sm:$0xff]
    %v48 = vld [vmem:[%s1 + $0x50] sm:$0xff]
    %v49 = vld [vmem:[%s1 + $0x58] sm:$0xff]
    %v50 = vld [vmem:[%s1 + $0x60] sm:$0xff]
    %v51 = vld [vmem:[%s1 + $0x68] sm:$0xff]
    %v52 = vld [vmem:[%s1 + $0x70] sm:$0xff]
    %v53 = vld [vmem:[%s1 + $0x78] sm:$0xff]
    %v54 = vmul.f32 %v38, %v38
    %v55 = vmul.f32 %v39, %v39
    %v56 = vmul.f32 %v40, %v40
    %v57 = vmul.f32 %v41, %v41
    %v58 = vmul.f32 %v42, %v42
    %v59 = vmul.f32 %v43, %v43
    %v60 = vmul.f32 %v44, %v44
    %v61 = vmul.f32 %v45, %v45
    %v62 = vmul.f32 %v46, %v46
    %v63 = vmul.f32 %v47, %v47
    %v64 = vmul.f32 %v48, %v48
    %v65 = vmul.f32 %v49, %v49
    %v66 = vmul.f32 %v50, %v50
    %v67 = vmul.f32 %v51, %v51
    %v68 = vmul.f32 %v52, %v52
    %v69 = vmul.f32 %v53, %v53
    %vm70 = vcmask 261120
    %v71 = vsel %vm70, %v54, 0.0
    %72 = vadd.xlane.f32.xlu0 %v71
    %v73 = vpop.xlane.xlu0 %72
    %v74 = vsel %vm70, %v55, 0.0
    %75 = vadd.xlane.f32.xlu0 %v74
    %v76 = vpop.xlane.xlu0 %75
    %v77 = vsel %vm70, %v56, 0.0
    %78 = vadd.xlane.f32.xlu0 %v77
    %v79 = vpop.xlane.xlu0 %78
    %v80 = vsel %vm70, %v57, 0.0
    %81 = vadd.xlane.f32.xlu0 %v80
    %v82 = vpop.xlane.xlu0 %81
    %v83 = vsel %vm70, %v58, 0.0
    %84 = vadd.xlane.f32.xlu0 %v83
    %v85 = vpop.xlane.xlu0 %84
    %v86 = vsel %vm70, %v59, 0.0
    %87 = vadd.xlane.f32.xlu0 %v86
    %v88 = vpop.xlane.xlu0 %87
    %v89 = vsel %vm70, %v60, 0.0
    %90 = vadd.xlane.f32.xlu0 %v89
    %v91 = vpop.xlane.xlu0 %90
    %v92 = vsel %vm70, %v61, 0.0
    %93 = vadd.xlane.f32.xlu0 %v92
    %v94 = vpop.xlane.xlu0 %93
    %v95 = vsel %vm70, %v62, 0.0
    %96 = vadd.xlane.f32.xlu0 %v95
    %v97 = vpop.xlane.xlu0 %96
    %v98 = vsel %vm70, %v63, 0.0
    %99 = vadd.xlane.f32.xlu0 %v98
    %v100 = vpop.xlane.xlu0 %99
    %v101 = vsel %vm70, %v64, 0.0
    %102 = vadd.xlane.f32.xlu0 %v101
    %v103 = vpop.xlane.xlu0 %102
    %v104 = vsel %vm70, %v65, 0.0
    %105 = vadd.xlane.f32.xlu0 %v104
    %v106 = vpop.xlane.xlu0 %105
    %v107 = vsel %vm70, %v66, 0.0
    %108 = vadd.xlane.f32.xlu0 %v107
    %v109 = vpop.xlane.xlu0 %108
    %v110 = vsel %vm70, %v67, 0.0
    %111 = vadd.xlane.f32.xlu0 %v110
    %v112 = vpop.xlane.xlu0 %111
    %v113 = vsel %vm70, %v68, 0.0
    %114 = vadd.xlane.f32.xlu0 %v113
    %v115 = vpop.xlane.xlu0 %114
    %v116 = vsel %vm70, %v69, 0.0
    %117 = vadd.xlane.f32.xlu0 %v116
    %v118 = vpop.xlane.xlu0 %117
    %v119 = vrsqrt.pop %v73
    %v120 = vrsqrt.pop %v76
    %v121 = vrsqrt.pop %v79
    %v122 = vrsqrt.pop %v82
    %v123 = vrsqrt.pop %v85
    %v124 = vrsqrt.pop %v88
    %v125 = vrsqrt.pop %v91
    %v126 = vrsqrt.pop %v94
    %v127 = vrsqrt.pop %v97
    %v128 = vrsqrt.pop %v100
    %v129 = vrsqrt.pop %v103
    %v130 = vrsqrt.pop %v106
    %v131 = vrsqrt.pop %v109
    %v132 = vrsqrt.pop %v112
    %v133 = vrsqrt.pop %v115
    %v134 = vrsqrt.pop %v118
    %v135 = vmin.f32 %v119, 1e+08
    %v136 = vmin.f32 %v120, 1e+08
    %v137 = vmin.f32 %v121, 1e+08
    %v138 = vmin.f32 %v122, 1e+08
    %v139 = vmin.f32 %v123, 1e+08
    %v140 = vmin.f32 %v124, 1e+08
    %v141 = vmin.f32 %v125, 1e+08
    %v142 = vmin.f32 %v126, 1e+08
    %v143 = vmin.f32 %v127, 1e+08
    %v144 = vmin.f32 %v128, 1e+08
    %v145 = vmin.f32 %v129, 1e+08
    %v146 = vmin.f32 %v130, 1e+08
    %v147 = vmin.f32 %v131, 1e+08
    %v148 = vmin.f32 %v132, 1e+08
    %v149 = vmin.f32 %v133, 1e+08
    %v150 = vmin.f32 %v134, 1e+08
    %v151 = vmul.f32 %v38, %v135
    %v152 = vmul.f32 %v39, %v136
    %v153 = vmul.f32 %v40, %v137
    %v154 = vmul.f32 %v41, %v138
    %v155 = vmul.f32 %v42, %v139
    %v156 = vmul.f32 %v43, %v140
    %v157 = vmul.f32 %v44, %v141
    %v158 = vmul.f32 %v45, %v142
    %v159 = vmul.f32 %v46, %v143
    %v160 = vmul.f32 %v47, %v144
    %v161 = vmul.f32 %v48, %v145
    %v162 = vmul.f32 %v49, %v146
    %v163 = vmul.f32 %v50, %v147
    %v164 = vmul.f32 %v51, %v148
    %v165 = vmul.f32 %v52, %v149
    %v166 = vmul.f32 %v53, %v150
    %v167 = vpack.c.bf16 %v152, %v151
    %v168 = vpack.c.bf16 %v154, %v153
    %v169 = vpack.c.bf16 %v156, %v155
    %v170 = vpack.c.bf16 %v158, %v157
    %v171 = vpack.c.bf16 %v160, %v159
    %v172 = vpack.c.bf16 %v162, %v161
    %v173 = vpack.c.bf16 %v164, %v163
    %v174 = vpack.c.bf16 %v166, %v165
    %v175 = vld [vmem:[#allocation2] sm:$0xff]
    %v177 = vsel %vm70, %v175, 0
    %v180 = vsel %vm70, %v167, 0
    %v183 = vsel %vm70, %v168, 0
    %v186 = vsel %vm70, %v169, 0
    %v189 = vsel %vm70, %v170, 0
    %v192 = vsel %vm70, %v171, 0
    %v195 = vsel %vm70, %v172, 0
    %v198 = vsel %vm70, %v173, 0
    %v201 = vsel %vm70, %v174, 0
    %203 = vmatprep.subr.bf16.mxu0 0
    %204 = vmatpush1.bf16.xpose.msra.mxu0 %v180
    %205 = vmatprep.subr.bf16.mxu0 0
    %206 = vmatpush1.bf16.xpose.msra.mxu0 %v183
    %207 = vmatprep.subr.bf16.mxu0 0
    %208 = vmatpush1.bf16.xpose.msra.mxu0 %v186
    %209 = vmatprep.subr.bf16.mxu0 0
    %210 = vmatpush1.bf16.xpose.msra.mxu0 %v189
    %211 = vmatprep.subr.bf16.mxu0 0
    %212 = vmatpush1.bf16.xpose.msra.mxu0 %v192
    %213 = vmatprep.subr.bf16.mxu0 0
    %214 = vmatpush1.bf16.xpose.msra.mxu0 %v195
    %215 = vmatprep.subr.bf16.mxu0 0
    %216 = vmatpush1.bf16.xpose.msra.mxu0 %v198
    %217 = vmatprep.subr.bf16.mxu0 0
    %218 = vmatpush1.bf16.xpose.msra.mxu0 %v201
    %219 = vmatprep.subr.bf16.mxu0 0
    %220 = vmatpush1.bf16.xpose.msra.mxu0 0
    %221 = vmatprep.subr.bf16.mxu0 0
    %222 = vmatpush1.bf16.xpose.msra.mxu0 0
    %223 = vmatprep.subr.bf16.mxu0 0
    %224 = vmatpush1.bf16.xpose.msra.mxu0 0
    %225 = vmatprep.subr.bf16.mxu0 0
    %226 = vmatpush1.bf16.xpose.msra.mxu0 0
    %227 = vmatprep.subr.bf16.mxu0 0
    %228 = vmatpush1.bf16.xpose.msra.mxu0 0
    %229 = vmatprep.subr.bf16.mxu0 0
    %230 = vmatpush1.bf16.xpose.msra.mxu0 0
    %231 = vmatprep.subr.bf16.mxu0 0
    %232 = vmatpush1.bf16.xpose.msra.mxu0 0
    %233 = vmatprep.subr.bf16.mxu0 0
    %234 = vmatpush1.bf16.xpose.msra.mxu0 0
    %235 = vmatprep.mubr.bf16.mxu0 0
    %236 = vmatmul.mubr.bf16.gmra.mrb[0].mxu0 %v177
    %v237 = vpop.f32.mrb[0].mxu0
    %v238 = vadd.f32 0.0, %v237
    %v239 = vpop.f32.mrb[0].mxu0
    %v240 = vpop.f32.mrb[0].mxu0
    %v241 = vadd.f32 0.0, %v240
    %v242 = vpop.f32.mrb[0].mxu0
    %243 = vdwg.mxu0
    %244 = vst [vmem:[#allocation3] sm:$0xff] %v238
    %245 = vst [vmem:[#allocation3 + $0x8] sm:$0xff] %v241
    // Predicated region
    $region14: #{tpu_custom_call.1} parent=1 // pred_check
      _
    $region15: #{tpu_custom_call.1} parent=1 // pred_check_branch
      %247 = sbr.rel (0) target = $region17
    $region16: #{tpu_custom_call.1} parent=1 // pred_region
      %s249 = ssub.s32 256, 256
      %250 = vsyncadd [#allocation4], %s249
      %s251 = sshll.u32 [#allocation3], 4
      %s252 = int_to_ptr.vmem [resolvable:$true] %s251
      %257 = dma.vmem_to_hbm [thread:$0]  %s252, 256, %s2, [#allocation4], 128, 128, 8
    $region17: #{tpu_custom_call.1} parent=1 // pred_fallthru
      _
    // Predicated region
    $region18: #{tpu_custom_call.1} parent=1 // pred_check
      _
    $region19: #{tpu_custom_call.1} parent=1 // pred_check_branch
      %259 = sbr.rel (0) target = $region21
    $region20: #{tpu_custom_call.1} parent=1 // pred_region
      %260 = dma.done [#allocation4], 256
    $region21: #{tpu_custom_call.1} parent=1 // pred_fallthru
      _
    %261 = vsyncpa [#allocation4], 1

</llo_original>
